<compile_context>
chip_gen: v6e
topology: v6e:2x2x1
jax: 0.10.0
libtpu: 0.0.40
codegen_flags: <defaults>
</compile_context>

<pallas_src>
import functools

import jax
import jax.numpy as jnp
from jax.experimental import pallas as pl
from jax.experimental.pallas import tpu as pltpu


VPAD = 128             # vocab padded to one full lane width
MAX_BLOCK_ROWS = 2048  # max packed output rows per grid step (multiple of 8)
MIN_STEPS = 4          # keep >= 4 grid steps so v7x megacore gets >= 2 per TC


def _round_up(x, m):
    return ((x + m - 1) // m) * m


def _gather_packed_kernel(vids_ref, tfull_ref, out_ref):
    """One grid step: packed embedding gather as one-hot @ (hi, lo) bf16 tables.

    vids_ref : (BG, PACK)              int32 -- p-th column pre-offset by p*VPAD
    tfull_ref: (2, PACK*VPAD, PACK*D)  bf16  -- [0]=hi plane, [1]=lo plane of the
                                                block-diagonal stacked table
    out_ref  : (BG, PACK*D)                  -- lane-dense packed embeddings
    """
    ids = vids_ref[...]                                    # (BG, PACK)
    bg, pack = ids.shape
    khalf = tfull_ref.shape[1]                             # PACK * VPAD

    # Single fused (BG, K) one-hot: the PACK ids were pre-offset into disjoint
    # 128-wide id ranges, so OR-ing PACK compares gives an exact 0/1 one-hot.
    lane_iota = jax.lax.broadcasted_iota(jnp.int32, (bg, khalf), 1)
    oh = ids[:, 0:1] == lane_iota
    for p in range(1, pack):                               # static unroll (<= 3 ORs)
        oh = jnp.logical_or(oh, ids[:, p:p + 1] == lane_iota)
    oh = oh.astype(jnp.bfloat16)                           # 0.0 / 1.0, exact in bf16

    # Two native-bf16 MXU matmuls (hi + lo planes) sharing the one-hot, with
    # f32 accumulation.  Each output element is hi[id] + lo[id]:
    # error vs the original f32 table <= ~2^-16 relative.
    acc = jnp.dot(oh, tfull_ref[0], preferred_element_type=jnp.float32)
    acc = acc + jnp.dot(oh, tfull_ref[1], preferred_element_type=jnp.float32)
    out_ref[...] = acc.astype(out_ref.dtype)


def make_mean_token_embed(table, first_cls, second_cls):
    """Returns a MeanTokenEmbed.forward callable.

    All table preparation (extend with cls rows, block-diagonal stack, bf16
    hi/lo split) runs ONCE here — hoisted out of the per-call path.
    """
    V, D = table.shape
    assert V + 2 <= VPAD - 1, "vocab + 2 cls rows + 1 zero pad row must fit in 128"
    pack = (128 // D) if (D <= 128 and 128 % D == 0) else 1

    first_id = V            # cls rows appended right after the real vocab
    second_id = V + 1
    pad_id = VPAD - 1       # all-zero row; padded tokens are sliced off later

    # Extended table: [vocab | first_cls | second_cls | zeros...]  -> (VPAD, D)
    table_ext = jnp.concatenate(
        [table.astype(jnp.float32),
         first_cls.reshape(1, D).astype(jnp.float32),
         second_cls.reshape(1, D).astype(jnp.float32),
         jnp.zeros((VPAD - V - 2, D), jnp.float32)], axis=0)

    # Block-diagonal stack: one K = pack*VPAD matmul emits PACK embeddings
    # lane-concatenated into a single 128-lane output row.  (pack*VPAD, pack*D)
    tstack = jnp.concatenate(
        [jnp.pad(table_ext, ((0, 0), (p * D, (pack - 1 - p) * D)))
         for p in range(pack)], axis=0)

    # bf16 hi/lo split: native MXU rate with near-f32 precision.
    t_hi = tstack.astype(jnp.bfloat16)
    t_lo = (tstack - t_hi.astype(jnp.float32)).astype(jnp.bfloat16)
    tfull = jax.block_until_ready(jnp.stack([t_hi, t_lo], axis=0))

    col_off = (jnp.arange(pack, dtype=jnp.int32) * VPAD)[None, :]   # (1, pack)
    khalf = pack * VPAD

    @functools.partial(jax.jit, static_argnames=("fw_cls", "sw_cls", "out_dtype"))
    def forward(ids, fw_cls=True, sw_cls=False, out_dtype=jnp.float32):
        B = ids.shape[0]
        ids2d = ids.reshape(B, -1).astype(jnp.int32)       # torch: x.reshape(b,-1,d)
        N = ids2d.shape[1]

        # Virtual token-id sequence: cls insertion + tail padding to a whole
        # number of packed rows, merged into ONE concatenate.
        n_out = N + int(fw_cls) + int(sw_cls)
        n_pad = _round_up(n_out, pack)
        parts = []
        if fw_cls:
            parts.append(jnp.full((B, 1), first_id, jnp.int32))
        if sw_cls:
            half = N // 2
            parts += [ids2d[:, :half],
                      jnp.full((B, 1), second_id, jnp.int32),
                      ids2d[:, half:]]
        else:
            parts.append(ids2d)
        if n_pad != n_out:
            parts.append(jnp.full((B, n_pad - n_out), pad_id, jnp.int32))
        vids = jnp.concatenate(parts, axis=1)              # (B, n_pad)

        # Pack PACK consecutive tokens per 128-lane output row.
        G = B * n_pad // pack
        # Largest block that still leaves >= MIN_STEPS grid steps (v7x megacore
        # + output-writeback pipelining), capped by MAX_BLOCK_ROWS.
        bg = max(8, min(MAX_BLOCK_ROWS, _round_up(pl.cdiv(G, MIN_STEPS), 8)))
        num_steps = pl.cdiv(G, bg)
        g_pad = num_steps * bg

        vids_packed = vids.reshape(G, pack)
        if g_pad != G:
            vids_packed = jnp.concatenate(
                [vids_packed, jnp.full((g_pad - G, pack), pad_id, jnp.int32)],
                axis=0)
        # Pre-offset column p by p*VPAD so the kernel builds ONE fused one-hot.
        vids_packed = vids_packed + col_off

        cost = pl.CostEstimate(
            flops=2 * 2 * g_pad * khalf * (pack * D),
            transcendentals=0,
            bytes_accessed=int(g_pad * pack * 4 + tfull.size * 2
                               + g_pad * pack * D * jnp.dtype(out_dtype).itemsize),
        )

        out2d = pl.pallas_call(
            _gather_packed_kernel,
            out_shape=jax.ShapeDtypeStruct((g_pad, pack * D), out_dtype),
            grid=(num_steps,),
            in_specs=[
                # ids block: lane dim `pack` (<128) is exempt from the (8,128)
                # rule because it equals the full array dim; ids volume is tiny.
                pl.BlockSpec((bg, pack), lambda i: (i, 0)),
                # Resident hi/lo table (constant index map; ~256 KiB).
                pl.BlockSpec((2, khalf, pack * D), lambda i: (0, 0, 0)),
            ],
            out_specs=pl.BlockSpec((bg, pack * D), lambda i: (i, 0)),
            compiler_params=pltpu.CompilerParams(
                dimension_semantics=("parallel",)),
            cost_estimate=cost,
        )(vids_packed, tfull)

        # (G, pack*D) rows are exactly the contiguous (B, n_pad, D) tokens.
        return out2d[:G].reshape(B, n_pad, D)[:, :n_out, :]

    return forward


def _reference(ids, table, first_cls, second_cls, *, fw_cls=True, sw_cls=False):
    x = jnp.take(table, ids.reshape(ids.shape[0], -1), axis=0)
    b, n, d = x.shape
    if sw_cls:
        sec = jnp.broadcast_to(second_cls.reshape(1, 1, d), (b, 1, d))
        x = jnp.concatenate([x[:, :n // 2], sec, x[:, n // 2:]], axis=1)
    if fw_cls:
        fst = jnp.broadcast_to(first_cls.reshape(1, 1, d), (b, 1, d))
        x = jnp.concatenate([fst, x], axis=1)
    return x


if __name__ == "__main__":
    d_embed = 32
    vocab = 101          # n = 101 in the module
    batch, seq = 2, 8

    key = jax.random.PRNGKey(0)
    k_ids, k_tab, k_first, k_second, k_big = jax.random.split(key, 5)

    # Deterministic in-script parameter init (matching torch init semantics):
    #   nn.Embedding weight ~ N(0, 1); first_cls, second_cls ~ N(0, 1)
    table = jax.random.normal(k_tab, (vocab, d_embed), dtype=jnp.float32)
    first_cls = jax.random.normal(k_first, (1, 1, d_embed), dtype=jnp.float32)
    second_cls = jax.random.normal(k_second, (1, 1, d_embed), dtype=jnp.float32)
    eos = jnp.zeros((1, 1, d_embed), dtype=jnp.float32)  # unused in forward

    fwd = make_mean_token_embed(table, first_cls, second_cls)

    x = jax.random.randint(k_ids, (batch, seq), 0, vocab, dtype=jnp.int32)

    # Default forward: fw_cls=True, sw_cls=False  ->  (B, N+1, D)
    out = jax.block_until_ready(fwd(x, fw_cls=True, sw_cls=False))
    ref = _reference(x, table, first_cls, second_cls, fw_cls=True, sw_cls=False)
    assert out.shape == (batch, seq + 1, d_embed), out.shape
    assert jnp.allclose(out, ref, atol=1e-4, rtol=1e-4), "mismatch vs reference"

    # sw_cls branch: (B, N+2, D)
    out2 = jax.block_until_ready(fwd(x, fw_cls=True, sw_cls=True))
    ref2 = _reference(x, table, first_cls, second_cls, fw_cls=True, sw_cls=True)
    assert out2.shape == (batch, seq + 2, d_embed), out2.shape
    assert jnp.allclose(out2, ref2, atol=1e-4, rtol=1e-4), "mismatch (sw_cls)"

    # Larger case exercising the multi-step pipelined / megacore-parallel grid.
    xb = jax.random.randint(k_big, (4, 600), 0, vocab, dtype=jnp.int32)
    out3 = jax.block_until_ready(fwd(xb, fw_cls=True, sw_cls=True))
    ref3 = _reference(xb, table, first_cls, second_cls, fw_cls=True, sw_cls=True)
    assert out3.shape == (4, 602, d_embed), out3.shape
    assert jnp.allclose(out3, ref3, atol=1e-4, rtol=1e-4), "mismatch (multi-step)"

    print("KERNEL_OK")
</pallas_src>

<mosaic_0001>
module attributes {stable_mosaic.version = 11 : i64} {
  func.func @_gather_packed_kernel(%arg0: i32, %arg1: memref<8x4xi32, #tpu.memory_space<vmem>>, %arg2: memref<2x512x128xbf16, #tpu.memory_space<vmem>>, %arg3: memref<8x128xf32, #tpu.memory_space<vmem>>) attributes {dimension_semantics = [#tpu.dimension_semantics<parallel>], iteration_bounds = array<i64: 1>, scalar_prefetch = 0 : i64, scratch_operands = 0 : i64, tpu.core_type = #tpu.core_type<tc>, window_params = [{transform_indices = @transform_0, window_bounds = array<i64: 8, 4>}, {pipeline_mode = #tpu.pipeline_mode<synchronous>, transform_indices = @transform_1, window_bounds = array<i64: 2, 512, 128>}, {transform_indices = @transform_2, window_bounds = array<i64: 8, 128>}]} {
    %c0 = arith.constant 0 : index
    %c0_0 = arith.constant 0 : index
    %0 = vector.load %arg1[%c0, %c0_0] : memref<8x4xi32, #tpu.memory_space<vmem>>, vector<8x4xi32>
    %1 = tpu.iota {dimensions = array<i32: 1>} : vector<8x512xi32>
    %2 = vector.extract_strided_slice %0 {offsets = [0, 0], sizes = [8, 1], strides = [1, 1]} : vector<8x4xi32> to vector<8x1xi32>
    %3 = vector.broadcast %2 : vector<8x1xi32> to vector<8x512xi32>
    %4 = arith.cmpi eq, %3, %1 : vector<8x512xi32>
    %5 = vector.extract_strided_slice %0 {offsets = [0, 1], sizes = [8, 1], strides = [1, 1]} : vector<8x4xi32> to vector<8x1xi32>
    %6 = vector.broadcast %5 : vector<8x1xi32> to vector<8x512xi32>
    %7 = arith.cmpi eq, %6, %1 : vector<8x512xi32>
    %8 = arith.ori %4, %7 : vector<8x512xi1>
    %9 = vector.extract_strided_slice %0 {offsets = [0, 2], sizes = [8, 1], strides = [1, 1]} : vector<8x4xi32> to vector<8x1xi32>
    %10 = vector.broadcast %9 : vector<8x1xi32> to vector<8x512xi32>
    %11 = arith.cmpi eq, %10, %1 : vector<8x512xi32>
    %12 = arith.ori %8, %11 : vector<8x512xi1>
    %13 = vector.extract_strided_slice %0 {offsets = [0, 3], sizes = [8, 1], strides = [1, 1]} : vector<8x4xi32> to vector<8x1xi32>
    %14 = vector.broadcast %13 : vector<8x1xi32> to vector<8x512xi32>
    %15 = arith.cmpi eq, %14, %1 : vector<8x512xi32>
    %16 = arith.ori %12, %15 : vector<8x512xi1>
    %17 = arith.extui %16 : vector<8x512xi1> to vector<8x512xi32>
    %18 = arith.sitofp %17 : vector<8x512xi32> to vector<8x512xf32>
    %19 = arith.truncf %18 : vector<8x512xf32> to vector<8x512xbf16>
    %c0_1 = arith.constant 0 : index
    %c0_2 = arith.constant 0 : index
    %c0_3 = arith.constant 0 : index
    %20 = vector.load %arg2[%c0_1, %c0_2, %c0_3] : memref<2x512x128xbf16, #tpu.memory_space<vmem>>, vector<1x512x128xbf16>
    %21 = vector.shape_cast %20 : vector<1x512x128xbf16> to vector<512x128xbf16>
    %cst = arith.constant dense<0.000000e+00> : vector<8x128xf32>
    %22 = tpu.matmul %19, %21, %cst {dimension_numbers = #tpu.dot_dimension_numbers<[1], [0], [0], [1], [0, 0, 1, 1], [], []>} : vector<8x512xbf16>, vector<512x128xbf16>, vector<8x128xf32> -> vector<8x128xf32>
    %c1 = arith.constant 1 : index
    %c0_4 = arith.constant 0 : index
    %c0_5 = arith.constant 0 : index
    %23 = vector.load %arg2[%c1, %c0_4, %c0_5] : memref<2x512x128xbf16, #tpu.memory_space<vmem>>, vector<1x512x128xbf16>
    %24 = vector.shape_cast %23 : vector<1x512x128xbf16> to vector<512x128xbf16>
    %cst_6 = arith.constant dense<0.000000e+00> : vector<8x128xf32>
    %25 = tpu.matmul %19, %24, %cst_6 {dimension_numbers = #tpu.dot_dimension_numbers<[1], [0], [0], [1], [0, 0, 1, 1], [], []>} : vector<8x512xbf16>, vector<512x128xbf16>, vector<8x128xf32> -> vector<8x128xf32>
    %26 = arith.addf %22, %25 : vector<8x128xf32>
    %c0_7 = arith.constant 0 : index
    %c0_8 = arith.constant 0 : index
    %27 = vector.load %arg3[%c0_7, %c0_8] : memref<8x128xf32, #tpu.memory_space<vmem>>, vector<8x128xf32>
    tpu.vector_store %arg3[%c0_7, %c0_8], %26 {strides = array<i32>} : memref<8x128xf32, #tpu.memory_space<vmem>>, vector<8x128xf32>,
    return
  }
  func.func @transform_0(%arg0: i32) -> (i32, i32) {
    %c0_i32 = arith.constant 0 : i32
    %c0_i32_0 = arith.constant 0 : i32
    return %arg0, %c0_i32 : i32, i32
  }
  func.func @transform_1(%arg0: i32) -> (i32, i32, i32) {
    %c0_i32 = arith.constant 0 : i32
    %c0_i32_0 = arith.constant 0 : i32
    %c0_i32_1 = arith.constant 0 : i32
    %c0_i32_2 = arith.constant 0 : i32
    return %c0_i32, %c0_i32_0, %c0_i32_1 : i32, i32, i32
  }
  func.func @transform_2(%arg0: i32) -> (i32, i32) {
    %c0_i32 = arith.constant 0 : i32
    %c0_i32_0 = arith.constant 0 : i32
    return %arg0, %c0_i32 : i32, i32
  }
}

</mosaic_0001>

<llo_original>
// kernel: forward.1
$region0: #{forward.1}
  #allocation0 [shape = 'u32[]', space=smem, size = 0x4, offset = 0x4, fixed_abs, tag = 'smem constant byte address 0x4 - core index']
  #allocation1 [shape = 'u32[144,128]{1,0:T(1,128)}', space=vmem, size = 0x12000, scoped, tag = 'internal scratch']
  %s0 = inlined_call_operand.vmem [shape: s32[8,4], index: 0, kind: input, shape index: {}]
  %s1 = inlined_call_operand.hbm [shape: bf16[2,512,128], index: 1, kind: input, shape index: {}]
  %s2 = inlined_call_operand.vmem [shape: f32[8,128], index: 2, kind: output, shape index: {}]
  %s3 = sld [smem:[#allocation0]]
  $region22: #{forward.1} parent=0
    _
  %s5 = ssub.s32 1, %s3
  %s6 = scalar_select 0, %s5, %s3
  $region1: #{forward.1} parent=0
    #allocation2 [shape = 'u8[262144]{0}', space=vmem, size = 0x40000, scoped, tag = 'input window, operand 1, single buffered']
    #allocation3 [shape = 's32[1]{0}', space=sflag, size = 0x4, scoped, tag = 'scoped memory for forward.1']
    %7 = vsyncpa [#allocation3], 0
    // Predicated region
    $region2: #{forward.1} parent=1 // pred_check
      _
    $region3: #{forward.1} parent=1 // pred_check_branch
      %9 = sbr.rel (0) target = $region5
    $region4: #{forward.1} parent=1 // pred_region
      _
    $region5: #{forward.1} parent=1 // pred_fallthru
      _
    // Predicated region
    $region6: #{forward.1} parent=1 // pred_check
      _
    $region7: #{forward.1} parent=1 // pred_check_branch
      %11 = sbr.rel (0) target = $region9
    $region8: #{forward.1} parent=1 // pred_region
      %s13 = ssub.s32 8192, 8192
      %14 = vsyncadd [#allocation3], %s13
      %s15 = sshll.u32 [#allocation2], 4
      %s16 = int_to_ptr.vmem [resolvable:$true] %s15
      %21 = dma.hbm_to_vmem [thread:$0]  %s1, 8192, %s16, [#allocation3], 64, 64, 4
    $region9: #{forward.1} parent=1 // pred_fallthru
      _
    // Predicated region
    $region10: #{forward.1} parent=1 // pred_check
      _
    $region11: #{forward.1} parent=1 // pred_check_branch
      %23 = sbr.rel (0) target = $region13
    $region12: #{forward.1} parent=1 // pred_region
      %24 = dma.done [#allocation3], 8192
    $region13: #{forward.1} parent=1 // pred_fallthru
      _
    %v26 = vld [vmem:[%s0] sm:$0xff]
    %v27 = vlaneseq
    %v28 = vand.u32 %v27, 127
    %v29 = vadd.s32 %v28, 128
    %v30 = vadd.s32 %v28, 256
    %v31 = vadd.s32 %v28, 384
    %32 = vset.pattern.permute.xlu0 0
    %33 = vperm.xlu0 %32, %v26
    %v34 = vpop.permute.xlu0 %33
    %vm35 = vcmp.eq.s32.totalorder %v34, %v28
    %vm36 = vcmp.eq.s32.totalorder %v34, %v29
    %vm37 = vcmp.eq.s32.totalorder %v34, %v30
    %vm38 = vcmp.eq.s32.totalorder %v34, %v31
    %39 = vset.pattern.permute.xlu0 1
    %40 = vperm.xlu0 %39, %v26
    %v41 = vpop.permute.xlu0 %40
    %vm42 = vcmp.eq.s32.totalorder %v41, %v28
    %vm43 = vcmp.eq.s32.totalorder %v41, %v29
    %vm44 = vcmp.eq.s32.totalorder %v41, %v30
    %vm45 = vcmp.eq.s32.totalorder %v41, %v31
    %vm46 = vmor %vm35, %vm42
    %vm47 = vmor %vm36, %vm43
    %vm48 = vmor %vm37, %vm44
    %vm49 = vmor %vm38, %vm45
    %50 = vset.pattern.permute.xlu0 2
    %51 = vperm.xlu0 %50, %v26
    %v52 = vpop.permute.xlu0 %51
    %vm53 = vcmp.eq.s32.totalorder %v52, %v28
    %vm54 = vcmp.eq.s32.totalorder %v52, %v29
    %vm55 = vcmp.eq.s32.totalorder %v52, %v30
    %vm56 = vcmp.eq.s32.totalorder %v52, %v31
    %vm57 = vmor %vm46, %vm53
    %vm58 = vmor %vm47, %vm54
    %vm59 = vmor %vm48, %vm55
    %vm60 = vmor %vm49, %vm56
    %61 = vset.pattern.permute.xlu0 3
    %62 = vperm.xlu0 %61, %v26
    %v63 = vpop.permute.xlu0 %62
    %vm64 = vcmp.eq.s32.totalorder %v63, %v28
    %vm65 = vcmp.eq.s32.totalorder %v63, %v29
    %vm66 = vcmp.eq.s32.totalorder %v63, %v30
    %vm67 = vcmp.eq.s32.totalorder %v63, %v31
    %vm68 = vmor %vm57, %vm64
    %vm69 = vmor %vm58, %vm65
    %vm70 = vmor %vm59, %vm66
    %vm71 = vmor %vm60, %vm67
    %v72 = vsel %vm68, 1, 0
    %v73 = vsel %vm69, 1, 0
    %v74 = vsel %vm70, 1, 0
    %v75 = vsel %vm71, 1, 0
    %v76 = vcvt.s32.f32 %v72
    %v77 = vcvt.s32.f32 %v73
    %v78 = vcvt.s32.f32 %v74
    %v79 = vcvt.s32.f32 %v75
    %v80 = vpack.c.bf16 %v76, %v76
    %v81 = vpack.c.bf16 %v77, %v77
    %v82 = vpack.c.bf16 %v78, %v78
    %v83 = vpack.c.bf16 %v79, %v79
    %v84 = vld [vmem:[#allocation2] sm:$0xf]
    %v85 = vld [vmem:[#allocation2 + $0x4] sm:$0xf]
    %v86 = vld [vmem:[#allocation2 + $0x8] sm:$0xf]
    %v87 = vld [vmem:[#allocation2 + $0xc] sm:$0xf]
    %v88 = vld [vmem:[#allocation2 + $0x10] sm:$0xf]
    %v89 = vld [vmem:[#allocation2 + $0x14] sm:$0xf]
    %v90 = vld [vmem:[#allocation2 + $0x18] sm:$0xf]
    %v91 = vld [vmem:[#allocation2 + $0x1c] sm:$0xf]
    %v92 = vld [vmem:[#allocation2 + $0x20] sm:$0xf]
    %v93 = vld [vmem:[#allocation2 + $0x24] sm:$0xf]
    %v94 = vld [vmem:[#allocation2 + $0x28] sm:$0xf]
    %v95 = vld [vmem:[#allocation2 + $0x2c] sm:$0xf]
    %v96 = vld [vmem:[#allocation2 + $0x30] sm:$0xf]
    %v97 = vld [vmem:[#allocation2 + $0x34] sm:$0xf]
    %v98 = vld [vmem:[#allocation2 + $0x38] sm:$0xf]
    %v99 = vld [vmem:[#allocation2 + $0x3c] sm:$0xf]
    %v100 = vld [vmem:[#allocation2 + $0x40] sm:$0xf]
    %v101 = vld [vmem:[#allocation2 + $0x44] sm:$0xf]
    %v102 = vld [vmem:[#allocation2 + $0x48] sm:$0xf]
    %v103 = vld [vmem:[#allocation2 + $0x4c] sm:$0xf]
    %v104 = vld [vmem:[#allocation2 + $0x50] sm:$0xf]
    %v105 = vld [vmem:[#allocation2 + $0x54] sm:$0xf]
    %v106 = vld [vmem:[#allocation2 + $0x58] sm:$0xf]
    %v107 = vld [vmem:[#allocation2 + $0x5c] sm:$0xf]
    %v108 = vld [vmem:[#allocation2 + $0x60] sm:$0xf]
    %v109 = vld [vmem:[#allocation2 + $0x64] sm:$0xf]
    %v110 = vld [vmem:[#allocation2 + $0x68] sm:$0xf]
    %v111 = vld [vmem:[#allocation2 + $0x6c] sm:$0xf]
    %v112 = vld [vmem:[#allocation2 + $0x70] sm:$0xf]
    %v113 = vld [vmem:[#allocation2 + $0x74] sm:$0xf]
    %v114 = vld [vmem:[#allocation2 + $0x78] sm:$0xf]
    %v115 = vld [vmem:[#allocation2 + $0x7c] sm:$0xf]
    %v116 = vld [vmem:[#allocation2 + $0x80] sm:$0xf]
    %v117 = vld [vmem:[#allocation2 + $0x84] sm:$0xf]
    %v118 = vld [vmem:[#allocation2 + $0x88] sm:$0xf]
    %v119 = vld [vmem:[#allocation2 + $0x8c] sm:$0xf]
    %v120 = vld [vmem:[#allocation2 + $0x90] sm:$0xf]
    %v121 = vld [vmem:[#allocation2 + $0x94] sm:$0xf]
    %v122 = vld [vmem:[#allocation2 + $0x98] sm:$0xf]
    %v123 = vld [vmem:[#allocation2 + $0x9c] sm:$0xf]
    %v124 = vld [vmem:[#allocation2 + $0xa0] sm:$0xf]
    %v125 = vld [vmem:[#allocation2 + $0xa4] sm:$0xf]
    %v126 = vld [vmem:[#allocation2 + $0xa8] sm:$0xf]
    %v127 = vld [vmem:[#allocation2 + $0xac] sm:$0xf]
    %v128 = vld [vmem:[#allocation2 + $0xb0] sm:$0xf]
    %v129 = vld [vmem:[#allocation2 + $0xb4] sm:$0xf]
    %v130 = vld [vmem:[#allocation2 + $0xb8] sm:$0xf]
    %v131 = vld [vmem:[#allocation2 + $0xbc] sm:$0xf]
    %v132 = vld [vmem:[#allocation2 + $0xc0] sm:$0xf]
    %v133 = vld [vmem:[#allocation2 + $0xc4] sm:$0xf]
    %v134 = vld [vmem:[#allocation2 + $0xc8] sm:$0xf]
    %v135 = vld [vmem:[#allocation2 + $0xcc] sm:$0xf]
    %v136 = vld [vmem:[#allocation2 + $0xd0] sm:$0xf]
    %v137 = vld [vmem:[#allocation2 + $0xd4] sm:$0xf]
    %v138 = vld [vmem:[#allocation2 + $0xd8] sm:$0xf]
    %v139 = vld [vmem:[#allocation2 + $0xdc] sm:$0xf]
    %v140 = vld [vmem:[#allocation2 + $0xe0] sm:$0xf]
    %v141 = vld [vmem:[#allocation2 + $0xe4] sm:$0xf]
    %v142 = vld [vmem:[#allocation2 + $0xe8] sm:$0xf]
    %v143 = vld [vmem:[#allocation2 + $0xec] sm:$0xf]
    %v144 = vld [vmem:[#allocation2 + $0xf0] sm:$0xf]
    %v145 = vld [vmem:[#allocation2 + $0xf4] sm:$0xf]
    %v146 = vld [vmem:[#allocation2 + $0xf8] sm:$0xf]
    %v147 = vld [vmem:[#allocation2 + $0xfc] sm:$0xf]
    %s148 = scalar_lea.vmem [#allocation2], 256
    %v149 = vld [vmem:[%s148] sm:$0xf]
    %v150 = vld [vmem:[%s148 + $0x4] sm:$0xf]
    %v151 = vld [vmem:[%s148 + $0x8] sm:$0xf]
    %v152 = vld [vmem:[%s148 + $0xc] sm:$0xf]
    %v153 = vld [vmem:[%s148 + $0x10] sm:$0xf]
    %v154 = vld [vmem:[%s148 + $0x14] sm:$0xf]
    %v155 = vld [vmem:[%s148 + $0x18] sm:$0xf]
    %v156 = vld [vmem:[%s148 + $0x1c] sm:$0xf]
    %v157 = vld [vmem:[%s148 + $0x20] sm:$0xf]
    %v158 = vld [vmem:[%s148 + $0x24] sm:$0xf]
    %v159 = vld [vmem:[%s148 + $0x28] sm:$0xf]
    %v160 = vld [vmem:[%s148 + $0x2c] sm:$0xf]
    %v161 = vld [vmem:[%s148 + $0x30] sm:$0xf]
    %v162 = vld [vmem:[%s148 + $0x34] sm:$0xf]
    %v163 = vld [vmem:[%s148 + $0x38] sm:$0xf]
    %v164 = vld [vmem:[%s148 + $0x3c] sm:$0xf]
    %v165 = vld [vmem:[%s148 + $0x40] sm:$0xf]
    %v166 = vld [vmem:[%s148 + $0x44] sm:$0xf]
    %v167 = vld [vmem:[%s148 + $0x48] sm:$0xf]
    %v168 = vld [vmem:[%s148 + $0x4c] sm:$0xf]
    %v169 = vld [vmem:[%s148 + $0x50] sm:$0xf]
    %v170 = vld [vmem:[%s148 + $0x54] sm:$0xf]
    %v171 = vld [vmem:[%s148 + $0x58] sm:$0xf]
    %v172 = vld [vmem:[%s148 + $0x5c] sm:$0xf]
    %v173 = vld [vmem:[%s148 + $0x60] sm:$0xf]
    %v174 = vld [vmem:[%s148 + $0x64] sm:$0xf]
    %v175 = vld [vmem:[%s148 + $0x68] sm:$0xf]
    %v176 = vld [vmem:[%s148 + $0x6c] sm:$0xf]
    %v177 = vld [vmem:[%s148 + $0x70] sm:$0xf]
    %v178 = vld [vmem:[%s148 + $0x74] sm:$0xf]
    %v179 = vld [vmem:[%s148 + $0x78] sm:$0xf]
    %v180 = vld [vmem:[%s148 + $0x7c] sm:$0xf]
    %v181 = vld [vmem:[%s148 + $0x80] sm:$0xf]
    %v182 = vld [vmem:[%s148 + $0x84] sm:$0xf]
    %v183 = vld [vmem:[%s148 + $0x88] sm:$0xf]
    %v184 = vld [vmem:[%s148 + $0x8c] sm:$0xf]
    %v185 = vld [vmem:[%s148 + $0x90] sm:$0xf]
    %v186 = vld [vmem:[%s148 + $0x94] sm:$0xf]
    %v187 = vld [vmem:[%s148 + $0x98] sm:$0xf]
    %v188 = vld [vmem:[%s148 + $0x9c] sm:$0xf]
    %v189 = vld [vmem:[%s148 + $0xa0] sm:$0xf]
    %v190 = vld [vmem:[%s148 + $0xa4] sm:$0xf]
    %v191 = vld [vmem:[%s148 + $0xa8] sm:$0xf]
    %v192 = vld [vmem:[%s148 + $0xac] sm:$0xf]
    %v193 = vld [vmem:[%s148 + $0xb0] sm:$0xf]
    %v194 = vld [vmem:[%s148 + $0xb4] sm:$0xf]
    %v195 = vld [vmem:[%s148 + $0xb8] sm:$0xf]
    %v196 = vld [vmem:[%s148 + $0xbc] sm:$0xf]
    %v197 = vld [vmem:[%s148 + $0xc0] sm:$0xf]
    %v198 = vld [vmem:[%s148 + $0xc4] sm:$0xf]
    %v199 = vld [vmem:[%s148 + $0xc8] sm:$0xf]
    %v200 = vld [vmem:[%s148 + $0xcc] sm:$0xf]
    %v201 = vld [vmem:[%s148 + $0xd0] sm:$0xf]
    %v202 = vld [vmem:[%s148 + $0xd4] sm:$0xf]
    %v203 = vld [vmem:[%s148 + $0xd8] sm:$0xf]
    %v204 = vld [vmem:[%s148 + $0xdc] sm:$0xf]
    %v205 = vld [vmem:[%s148 + $0xe0] sm:$0xf]
    %v206 = vld [vmem:[%s148 + $0xe4] sm:$0xf]
    %v207 = vld [vmem:[%s148 + $0xe8] sm:$0xf]
    %v208 = vld [vmem:[%s148 + $0xec] sm:$0xf]
    %v209 = vld [vmem:[%s148 + $0xf0] sm:$0xf]
    %v210 = vld [vmem:[%s148 + $0xf4] sm:$0xf]
    %v211 = vld [vmem:[%s148 + $0xf8] sm:$0xf]
    %v212 = vld [vmem:[%s148 + $0xfc] sm:$0xf]
    %v277 = vunpack.c.l.b16 %v149
    %v278 = vunpack.c.l.b16 %v150
    %v279 = vunpack.c.l.b16 %v151
    %v280 = vunpack.c.l.b16 %v152
    %v281 = vunpack.c.l.b16 %v153
    %v282 = vunpack.c.l.b16 %v154
    %v283 = vunpack.c.l.b16 %v155
    %v284 = vunpack.c.l.b16 %v156
    %v285 = vunpack.c.l.b16 %v157
    %v286 = vunpack.c.l.b16 %v158
    %v287 = vunpack.c.l.b16 %v159
    %v288 = vunpack.c.l.b16 %v160
    %v289 = vunpack.c.l.b16 %v161
    %v290 = vunpack.c.l.b16 %v162
    %v291 = vunpack.c.l.b16 %v163
    %v292 = vunpack.c.l.b16 %v164
    %v293 = vunpack.c.l.b16 %v165
    %v294 = vunpack.c.l.b16 %v166
    %v295 = vunpack.c.l.b16 %v167
    %v296 = vunpack.c.l.b16 %v168
    %v297 = vunpack.c.l.b16 %v169
    %v298 = vunpack.c.l.b16 %v170
    %v299 = vunpack.c.l.b16 %v171
    %v300 = vunpack.c.l.b16 %v172
    %v301 = vunpack.c.l.b16 %v173
    %v302 = vunpack.c.l.b16 %v174
    %v303 = vunpack.c.l.b16 %v175
    %v304 = vunpack.c.l.b16 %v176
    %v305 = vunpack.c.l.b16 %v177
    %v306 = vunpack.c.l.b16 %v178
    %v307 = vunpack.c.l.b16 %v179
    %v308 = vunpack.c.l.b16 %v180
    %v309 = vunpack.c.l.b16 %v181
    %v310 = vunpack.c.l.b16 %v182
    %v311 = vunpack.c.l.b16 %v183
    %v312 = vunpack.c.l.b16 %v184
    %v313 = vunpack.c.l.b16 %v185
    %v314 = vunpack.c.l.b16 %v186
    %v315 = vunpack.c.l.b16 %v187
    %v316 = vunpack.c.l.b16 %v188
    %v317 = vunpack.c.l.b16 %v189
    %v318 = vunpack.c.l.b16 %v190
    %v319 = vunpack.c.l.b16 %v191
    %v320 = vunpack.c.l.b16 %v192
    %v321 = vunpack.c.l.b16 %v193
    %v322 = vunpack.c.l.b16 %v194
    %v323 = vunpack.c.l.b16 %v195
    %v324 = vunpack.c.l.b16 %v196
    %v325 = vunpack.c.l.b16 %v197
    %v326 = vunpack.c.l.b16 %v198
    %v327 = vunpack.c.l.b16 %v199
    %v328 = vunpack.c.l.b16 %v200
    %v329 = vunpack.c.l.b16 %v201
    %v330 = vunpack.c.l.b16 %v202
    %v331 = vunpack.c.l.b16 %v203
    %v332 = vunpack.c.l.b16 %v204
    %v333 = vunpack.c.l.b16 %v205
    %v334 = vunpack.c.l.b16 %v206
    %v335 = vunpack.c.l.b16 %v207
    %v336 = vunpack.c.l.b16 %v208
    %v337 = vunpack.c.l.b16 %v209
    %v338 = vunpack.c.l.b16 %v210
    %v339 = vunpack.c.l.b16 %v211
    %v340 = vunpack.c.l.b16 %v212
    %v341 = vpack.c.b16 %v278, %v277
    %v342 = vpack.c.b16 %v280, %v279
    %v343 = vpack.c.b16 %v282, %v281
    %v344 = vpack.c.b16 %v284, %v283
    %v345 = vpack.c.b16 %v286, %v285
    %v346 = vpack.c.b16 %v288, %v287
    %v347 = vpack.c.b16 %v290, %v289
    %v348 = vpack.c.b16 %v292, %v291
    %v349 = vpack.c.b16 %v294, %v293
    %v350 = vpack.c.b16 %v296, %v295
    %v351 = vpack.c.b16 %v298, %v297
    %v352 = vpack.c.b16 %v300, %v299
    %v353 = vpack.c.b16 %v302, %v301
    %v354 = vpack.c.b16 %v304, %v303
    %v355 = vpack.c.b16 %v306, %v305
    %v356 = vpack.c.b16 %v308, %v307
    %v357 = vpack.c.b16 %v310, %v309
    %v358 = vpack.c.b16 %v312, %v311
    %v359 = vpack.c.b16 %v314, %v313
    %v360 = vpack.c.b16 %v316, %v315
    %v361 = vpack.c.b16 %v318, %v317
    %v362 = vpack.c.b16 %v320, %v319
    %v363 = vpack.c.b16 %v322, %v321
    %v364 = vpack.c.b16 %v324, %v323
    %v365 = vpack.c.b16 %v326, %v325
    %v366 = vpack.c.b16 %v328, %v327
    %v367 = vpack.c.b16 %v330, %v329
    %v368 = vpack.c.b16 %v332, %v331
    %v369 = vpack.c.b16 %v334, %v333
    %v370 = vpack.c.b16 %v336, %v335
    %v371 = vpack.c.b16 %v338, %v337
    %v372 = vpack.c.b16 %v340, %v339
    %405 = vmatprep.subr.bf16.mxu0 0
    %406 = vmatpush1.bf16.msra.mxu0 %v348
    %407 = vmatprep.subr.bf16.mxu0 0
    %408 = vmatpush1.bf16.msra.mxu0 %v347
    %409 = vmatprep.subr.bf16.mxu0 0
    %410 = vmatpush1.bf16.msra.mxu0 %v346
    %411 = vmatprep.subr.bf16.mxu0 0
    %412 = vmatpush1.bf16.msra.mxu0 %v345
    %413 = vmatprep.subr.bf16.mxu0 0
    %414 = vmatpush1.bf16.msra.mxu0 %v344
    %415 = vmatprep.subr.bf16.mxu0 0
    %416 = vmatpush1.bf16.msra.mxu0 %v343
    %417 = vmatprep.subr.bf16.mxu0 0
    %418 = vmatpush1.bf16.msra.mxu0 %v342
    %419 = vmatprep.subr.bf16.mxu0 0
    %420 = vmatpush1.bf16.msra.mxu0 %v341
    %421 = vmatprep.subr.bf16.mxu0 0
    %422 = vmatpush2.bf16.msra.mxu0 %v356
    %423 = vmatprep.subr.bf16.mxu0 0
    %424 = vmatpush2.bf16.msra.mxu0 %v355
    %425 = vmatprep.subr.bf16.mxu0 0
    %426 = vmatpush2.bf16.msra.mxu0 %v354
    %427 = vmatprep.subr.bf16.mxu0 0
    %428 = vmatpush2.bf16.msra.mxu0 %v353
    %429 = vmatprep.subr.bf16.mxu0 0
    %430 = vmatpush2.bf16.msra.mxu0 %v352
    %431 = vmatprep.subr.bf16.mxu0 0
    %432 = vmatpush2.bf16.msra.mxu0 %v351
    %433 = vmatprep.subr.bf16.mxu0 0
    %434 = vmatpush2.bf16.msra.mxu0 %v350
    %435 = vmatprep.subr.bf16.mxu0 0
    %436 = vmatpush2.bf16.msra.mxu0 %v349
    %437 = vmatprep.mubr.bf16.mxu0 %v81
    %438 = vmatmul.mubr.bf16.gmra.mxu0 %v80
    %v439 = vpop.f32.mrf.mxu0
    %v440 = vadd.f32 0.0, %v439
    %v441 = vpop.f32.mrf.mxu0
    %v442 = vpop.f32.mrf.mxu0
    %v443 = vpop.f32.mrf.mxu0
    %444 = vdwg.mxu0
    %445 = vmatprep.subr.bf16.mxu0 0
    %446 = vmatpush1.bf16.msra.mxu0 %v364
    %447 = vmatprep.subr.bf16.mxu0 0
    %448 = vmatpush1.bf16.msra.mxu0 %v363
    %449 = vmatprep.subr.bf16.mxu0 0
    %450 = vmatpush1.bf16.msra.mxu0 %v362
    %451 = vmatprep.subr.bf16.mxu0 0
    %452 = vmatpush1.bf16.msra.mxu0 %v361
    %453 = vmatprep.subr.bf16.mxu0 0
    %454 = vmatpush1.bf16.msra.mxu0 %v360
    %455 = vmatprep.subr.bf16.mxu0 0
    %456 = vmatpush1.bf16.msra.mxu0 %v359
    %457 = vmatprep.subr.bf16.mxu0 0
    %458 = vmatpush1.bf16.msra.mxu0 %v358
    %459 = vmatprep.subr.bf16.mxu0 0
    %460 = vmatpush1.bf16.msra.mxu0 %v357
    %461 = vmatprep.subr.bf16.mxu0 0
    %462 = vmatpush2.bf16.msra.mxu0 %v372
    %463 = vmatprep.subr.bf16.mxu0 0
    %464 = vmatpush2.bf16.msra.mxu0 %v371
    %465 = vmatprep.subr.bf16.mxu0 0
    %466 = vmatpush2.bf16.msra.mxu0 %v370
    %467 = vmatprep.subr.bf16.mxu0 0
    %468 = vmatpush2.bf16.msra.mxu0 %v369
    %469 = vmatprep.subr.bf16.mxu0 0
    %470 = vmatpush2.bf16.msra.mxu0 %v368
    %471 = vmatprep.subr.bf16.mxu0 0
    %472 = vmatpush2.bf16.msra.mxu0 %v367
    %473 = vmatprep.subr.bf16.mxu0 0
    %474 = vmatpush2.bf16.msra.mxu0 %v366
    %475 = vmatprep.subr.bf16.mxu0 0
    %476 = vmatpush2.bf16.msra.mxu0 %v365
    %477 = vmatprep.mubr.bf16.mxu0 %v83
    %478 = vmatmul.mubr.bf16.gmra.mxu0 %v82
    %v479 = vpop.f32.mrf.mxu0
    %v480 = vadd.f32 %v440, %v479
    %v481 = vpop.f32.mrf.mxu0
    %v482 = vpop.f32.mrf.mxu0
    %v483 = vpop.f32.mrf.mxu0
    %484 = vdwg.mxu0
    %v549 = vunpack.c.l.b16 %v84
    %v550 = vunpack.c.l.b16 %v85
    %v551 = vunpack.c.l.b16 %v86
    %v552 = vunpack.c.l.b16 %v87
    %v553 = vunpack.c.l.b16 %v88
    %v554 = vunpack.c.l.b16 %v89
    %v555 = vunpack.c.l.b16 %v90
    %v556 = vunpack.c.l.b16 %v91
    %v557 = vunpack.c.l.b16 %v92
    %v558 = vunpack.c.l.b16 %v93
    %v559 = vunpack.c.l.b16 %v94
    %v560 = vunpack.c.l.b16 %v95
    %v561 = vunpack.c.l.b16 %v96
    %v562 = vunpack.c.l.b16 %v97
    %v563 = vunpack.c.l.b16 %v98
    %v564 = vunpack.c.l.b16 %v99
    %v565 = vunpack.c.l.b16 %v100
    %v566 = vunpack.c.l.b16 %v101
    %v567 = vunpack.c.l.b16 %v102
    %v568 = vunpack.c.l.b16 %v103
    %v569 = vunpack.c.l.b16 %v104
    %v570 = vunpack.c.l.b16 %v105
    %v571 = vunpack.c.l.b16 %v106
    %v572 = vunpack.c.l.b16 %v107
    %v573 = vunpack.c.l.b16 %v108
    %v574 = vunpack.c.l.b16 %v109
    %v575 = vunpack.c.l.b16 %v110
    %v576 = vunpack.c.l.b16 %v111
    %v577 = vunpack.c.l.b16 %v112
    %v578 = vunpack.c.l.b16 %v113
    %v579 = vunpack.c.l.b16 %v114
    %v580 = vunpack.c.l.b16 %v115
    %v581 = vunpack.c.l.b16 %v116
    %v582 = vunpack.c.l.b16 %v117
    %v583 = vunpack.c.l.b16 %v118
    %v584 = vunpack.c.l.b16 %v119
    %v585 = vunpack.c.l.b16 %v120
    %v586 = vunpack.c.l.b16 %v121
    %v587 = vunpack.c.l.b16 %v122
    %v588 = vunpack.c.l.b16 %v123
    %v589 = vunpack.c.l.b16 %v124
    %v590 = vunpack.c.l.b16 %v125
    %v591 = vunpack.c.l.b16 %v126
    %v592 = vunpack.c.l.b16 %v127
    %v593 = vunpack.c.l.b16 %v128
    %v594 = vunpack.c.l.b16 %v129
    %v595 = vunpack.c.l.b16 %v130
    %v596 = vunpack.c.l.b16 %v131
    %v597 = vunpack.c.l.b16 %v132
    %v598 = vunpack.c.l.b16 %v133
    %v599 = vunpack.c.l.b16 %v134
    %v600 = vunpack.c.l.b16 %v135
    %v601 = vunpack.c.l.b16 %v136
    %v602 = vunpack.c.l.b16 %v137
    %v603 = vunpack.c.l.b16 %v138
    %v604 = vunpack.c.l.b16 %v139
    %v605 = vunpack.c.l.b16 %v140
    %v606 = vunpack.c.l.b16 %v141
    %v607 = vunpack.c.l.b16 %v142
    %v608 = vunpack.c.l.b16 %v143
    %v609 = vunpack.c.l.b16 %v144
    %v610 = vunpack.c.l.b16 %v145
    %v611 = vunpack.c.l.b16 %v146
    %v612 = vunpack.c.l.b16 %v147
    %v613 = vpack.c.b16 %v550, %v549
    %v614 = vpack.c.b16 %v552, %v551
    %v615 = vpack.c.b16 %v554, %v553
    %v616 = vpack.c.b16 %v556, %v555
    %v617 = vpack.c.b16 %v558, %v557
    %v618 = vpack.c.b16 %v560, %v559
    %v619 = vpack.c.b16 %v562, %v561
    %v620 = vpack.c.b16 %v564, %v563
    %v621 = vpack.c.b16 %v566, %v565
    %v622 = vpack.c.b16 %v568, %v567
    %v623 = vpack.c.b16 %v570, %v569
    %v624 = vpack.c.b16 %v572, %v571
    %v625 = vpack.c.b16 %v574, %v573
    %v626 = vpack.c.b16 %v576, %v575
    %v627 = vpack.c.b16 %v578, %v577
    %v628 = vpack.c.b16 %v580, %v579
    %v629 = vpack.c.b16 %v582, %v581
    %v630 = vpack.c.b16 %v584, %v583
    %v631 = vpack.c.b16 %v586, %v585
    %v632 = vpack.c.b16 %v588, %v587
    %v633 = vpack.c.b16 %v590, %v589
    %v634 = vpack.c.b16 %v592, %v591
    %v635 = vpack.c.b16 %v594, %v593
    %v636 = vpack.c.b16 %v596, %v595
    %v637 = vpack.c.b16 %v598, %v597
    %v638 = vpack.c.b16 %v600, %v599
    %v639 = vpack.c.b16 %v602, %v601
    %v640 = vpack.c.b16 %v604, %v603
    %v641 = vpack.c.b16 %v606, %v605
    %v642 = vpack.c.b16 %v608, %v607
    %v643 = vpack.c.b16 %v610, %v609
    %v644 = vpack.c.b16 %v612, %v611
    %677 = vmatprep.subr.bf16.mxu0 0
    %678 = vmatpush1.bf16.msra.mxu0 %v620
    %679 = vmatprep.subr.bf16.mxu0 0
    %680 = vmatpush1.bf16.msra.mxu0 %v619
    %681 = vmatprep.subr.bf16.mxu0 0
    %682 = vmatpush1.bf16.msra.mxu0 %v618
    %683 = vmatprep.subr.bf16.mxu0 0
    %684 = vmatpush1.bf16.msra.mxu0 %v617
    %685 = vmatprep.subr.bf16.mxu0 0
    %686 = vmatpush1.bf16.msra.mxu0 %v616
    %687 = vmatprep.subr.bf16.mxu0 0
    %688 = vmatpush1.bf16.msra.mxu0 %v615
    %689 = vmatprep.subr.bf16.mxu0 0
    %690 = vmatpush1.bf16.msra.mxu0 %v614
    %691 = vmatprep.subr.bf16.mxu0 0
    %692 = vmatpush1.bf16.msra.mxu0 %v613
    %693 = vmatprep.subr.bf16.mxu0 0
    %694 = vmatpush2.bf16.msra.mxu0 %v628
    %695 = vmatprep.subr.bf16.mxu0 0
    %696 = vmatpush2.bf16.msra.mxu0 %v627
    %697 = vmatprep.subr.bf16.mxu0 0
    %698 = vmatpush2.bf16.msra.mxu0 %v626
    %699 = vmatprep.subr.bf16.mxu0 0
    %700 = vmatpush2.bf16.msra.mxu0 %v625
    %701 = vmatprep.subr.bf16.mxu0 0
    %702 = vmatpush2.bf16.msra.mxu0 %v624
    %703 = vmatprep.subr.bf16.mxu0 0
    %704 = vmatpush2.bf16.msra.mxu0 %v623
    %705 = vmatprep.subr.bf16.mxu0 0
    %706 = vmatpush2.bf16.msra.mxu0 %v622
    %707 = vmatprep.subr.bf16.mxu0 0
    %708 = vmatpush2.bf16.msra.mxu0 %v621
    %709 = vmatprep.mubr.bf16.mxu0 %v81
    %710 = vmatmul.mubr.bf16.gmra.mxu0 %v80
    %v711 = vpop.f32.mrf.mxu0
    %v712 = vadd.f32 %v480, %v711
    %v713 = vpop.f32.mrf.mxu0
    %v714 = vpop.f32.mrf.mxu0
    %v715 = vpop.f32.mrf.mxu0
    %716 = vdwg.mxu0
    %717 = vmatprep.subr.bf16.mxu0 0
    %718 = vmatpush1.bf16.msra.mxu0 %v636
    %719 = vmatprep.subr.bf16.mxu0 0
    %720 = vmatpush1.bf16.msra.mxu0 %v635
    %721 = vmatprep.subr.bf16.mxu0 0
    %722 = vmatpush1.bf16.msra.mxu0 %v634
    %723 = vmatprep.subr.bf16.mxu0 0
    %724 = vmatpush1.bf16.msra.mxu0 %v633
    %725 = vmatprep.subr.bf16.mxu0 0
    %726 = vmatpush1.bf16.msra.mxu0 %v632
    %727 = vmatprep.subr.bf16.mxu0 0
    %728 = vmatpush1.bf16.msra.mxu0 %v631
    %729 = vmatprep.subr.bf16.mxu0 0
    %730 = vmatpush1.bf16.msra.mxu0 %v630
    %731 = vmatprep.subr.bf16.mxu0 0
    %732 = vmatpush1.bf16.msra.mxu0 %v629
    %733 = vmatprep.subr.bf16.mxu0 0
    %734 = vmatpush2.bf16.msra.mxu0 %v644
    %735 = vmatprep.subr.bf16.mxu0 0
    %736 = vmatpush2.bf16.msra.mxu0 %v643
    %737 = vmatprep.subr.bf16.mxu0 0
    %738 = vmatpush2.bf16.msra.mxu0 %v642
    %739 = vmatprep.subr.bf16.mxu0 0
    %740 = vmatpush2.bf16.msra.mxu0 %v641
    %741 = vmatprep.subr.bf16.mxu0 0
    %742 = vmatpush2.bf16.msra.mxu0 %v640
    %743 = vmatprep.subr.bf16.mxu0 0
    %744 = vmatpush2.bf16.msra.mxu0 %v639
    %745 = vmatprep.subr.bf16.mxu0 0
    %746 = vmatpush2.bf16.msra.mxu0 %v638
    %747 = vmatprep.subr.bf16.mxu0 0
    %748 = vmatpush2.bf16.msra.mxu0 %v637
    %749 = vmatprep.mubr.bf16.mxu0 %v83
    %750 = vmatmul.mubr.bf16.gmra.mxu0 %v82
    %v751 = vpop.f32.mrf.mxu0
    %v752 = vadd.f32 %v712, %v751
    %v753 = vpop.f32.mrf.mxu0
    %v754 = vpop.f32.mrf.mxu0
    %v755 = vpop.f32.mrf.mxu0
    %756 = vdwg.mxu0
    %757 = vst [vmem:[%s2] sm:$0xff] %v752
    // Predicated region
    $region14: #{forward.1} parent=1 // pred_check
      _
    $region15: #{forward.1} parent=1 // pred_check_branch
      %759 = sbr.rel (0) target = $region17
    $region16: #{forward.1} parent=1 // pred_region
      _
    $region17: #{forward.1} parent=1 // pred_fallthru
      _
    // Predicated region
    $region18: #{forward.1} parent=1 // pred_check
      _
    $region19: #{forward.1} parent=1 // pred_check_branch
      %761 = sbr.rel (0) target = $region21
    $region20: #{forward.1} parent=1 // pred_region
      _
    $region21: #{forward.1} parent=1 // pred_fallthru
      _
    %762 = vsyncpa [#allocation3], 1

</llo_original>
